<compile_context>
chip_gen: v5e
topology: v5e:2x2
jax: 0.10.0
libtpu: 0.0.40
codegen_flags: <defaults>
</compile_context>

<pallas_src>
import jax
import jax.numpy as jnp
from jax.experimental import pallas as pl
from jax.experimental.pallas import tpu as pltpu


def _round_up(v, m):
    return -(-v // m) * m


def _round_down(v, m):
    return (v // m) * m


def _linear_kernel(x_ref, w_ref, b_ref, o_ref):
    # Single K block: x:(tb,F) @ w:(F,C_pad) -> (tb,C_pad), + bias.
    acc = jnp.dot(x_ref[...], w_ref[...], preferred_element_type=jnp.float32)
    o_ref[...] = (acc + b_ref[...]).astype(o_ref.dtype)


def _linear_accum_kernel(x_ref, w_ref, b_ref, o_ref, acc_ref):
    # K-tiled: accumulate partial products in a resident f32 VMEM scratch.
    k = pl.program_id(1)

    @pl.when(k == 0)
    def _():
        acc_ref[...] = jnp.zeros_like(acc_ref)

    acc_ref[...] += jnp.dot(x_ref[...], w_ref[...],
                            preferred_element_type=jnp.float32)

    @pl.when(k == pl.num_programs(1) - 1)
    def _():
        o_ref[...] = (acc_ref[...] + b_ref[...]).astype(o_ref.dtype)


def logistic_regression_forward(x, weight, bias, *, cast_to_bf16=False,
                                force_pallas=False, tile_b=None, tile_k=None):
    """Forward pass of LogisticRegression (= nn.Linear(n_features, n_classes)).

    x:      [B, n_features]
    weight: [n_classes, n_features]   (PyTorch nn.Linear layout)
    bias:   [n_classes]
    returns [B, n_classes] logits
    """
    B, F = x.shape
    C = weight.shape[0]

    # Tiny problems: fixed pallas_call/DMA setup overhead dwarfs the matmul.
    if not force_pallas and B * F * C < (1 << 16):
        return (x @ weight.T + bias[None, :]).astype(x.dtype)

    in_dtype = jnp.bfloat16 if cast_to_bf16 else x.dtype
    out_dtype = x.dtype
    in_bytes = jnp.dtype(in_dtype).itemsize
    out_bytes = jnp.dtype(out_dtype).itemsize

    # Lane-dense output: pad the class dim to a multiple of 128.
    C_pad = _round_up(C, 128)

    # ---- Per-generation VMEM budget (v5e/v6e: 128 MiB, v7x: 64 MiB). ----
    try:
        vmem_cap = int(pltpu.get_tpu_info().vmem_capacity_bytes)
    except Exception:  # off-device tracing / older runtime
        vmem_cap = 64 << 20
    budget = min(int(0.7 * vmem_cap), 64 << 20)   # ~45 MiB on v7x, 64 MiB elsewhere
    bias_bytes = 8 * C_pad * 4                    # (1,C_pad) block, sublane-padded

    # ---- K (feature) tiling: keep the whole weight resident if it fits. ----
    min_rows = min(max(B, 8), 128)
    resident_cost = (F * C_pad * in_bytes + bias_bytes
                     + min_rows * (2 * F * in_bytes + 2 * C_pad * out_bytes))
    if tile_k is not None:
        tk = int(tile_k)
    elif resident_cost <= budget:
        tk = F
    else:
        # Stream the weight along K; give its double-buffered stream <= budget/2.
        tk = (budget // 2) // max(2 * C_pad * in_bytes, 1)

    if tk < F:
        tk = max(_round_down(tk, 128), 128)       # K tiles must be lane-aligned
    if tk >= F:
        tk, nk, F_pad, w_bufs = F, 1, F, 1        # resident, single-buffered weight
    else:
        F_pad = _round_up(F, tk)                  # zero-pad so last K block is exact
        nk = F_pad // tk
        w_bufs = 2
    # TODO(synk): add a class (C) grid axis for n_classes so large that even one
    # (tk, C_pad) weight block cannot fit the VMEM budget.

    # ---- Batch tile from the remaining VMEM budget. ----
    w_vmem = w_bufs * tk * C_pad * in_bytes
    row_cost = (2 * tk * in_bytes + 2 * C_pad * out_bytes
                + (C_pad * 4 if nk > 1 else 0))   # x dbl-buf + out dbl-buf + acc
    if tile_b is not None:
        tb = int(tile_b)
    else:
        tb = (budget - w_vmem - bias_bytes) // row_cost
    tb = max(8, min(int(tb), 4096, B))
    # Keep >=2 (>=4) batch tiles when the batch is large -> both v7x TCs busy.
    if B >= 2048:
        tb = min(tb, _round_up(pl.cdiv(B, 4), 8))
    elif B >= 512:
        tb = min(tb, _round_up(pl.cdiv(B, 2), 8))
    if tb < B:
        tb = max(8, _round_down(tb, 8))           # sublane-aligned partial tiles
    else:
        tb = B
    nb = pl.cdiv(B, tb)

    # ---- One-time (tiny) host-side weight transpose + zero padding. ----
    w_t = weight.astype(in_dtype).T               # [F, C]
    w_t = jnp.pad(w_t, ((0, F_pad - F), (0, C_pad - C)))
    b2d = jnp.pad(bias.astype(jnp.float32), (0, C_pad - C)).reshape(1, C_pad)
    x_in = x.astype(in_dtype)
    if F_pad != F:                                # only in the K-streamed regime
        x_in = jnp.pad(x_in, ((0, 0), (0, F_pad - F)))

    footprint = (2 * tb * tk * in_bytes + w_vmem + 2 * tb * C_pad * out_bytes
                 + bias_bytes + (tb * C_pad * 4 if nk > 1 else 0))
    vmem_limit = int(min(vmem_cap, max(footprint + (4 << 20), 32 << 20)))

    if nk == 1:
        grid = (nb,)
        in_specs = [
            pl.BlockSpec((tb, F), lambda i: (i, 0)),                    # x tile
            pl.BlockSpec((F, C_pad), lambda i: (0, 0),
                         pipeline_mode=pl.Buffered(1)),                 # resident W^T
            pl.BlockSpec((1, C_pad), lambda i: (0, 0),
                         pipeline_mode=pl.Buffered(1)),                 # resident bias
        ]
        out_specs = pl.BlockSpec((tb, C_pad), lambda i: (i, 0))
        scratch_shapes = []
        kernel = _linear_kernel
        dims = ("parallel",)
    else:
        grid = (nb, nk)                                                 # K axis last
        in_specs = [
            pl.BlockSpec((tb, tk), lambda i, k: (i, k)),                # x tile
            pl.BlockSpec((tk, C_pad), lambda i, k: (k, 0)),             # streamed W^T
            pl.BlockSpec((1, C_pad), lambda i, k: (0, 0),
                         pipeline_mode=pl.Buffered(1)),                 # resident bias
        ]
        out_specs = pl.BlockSpec((tb, C_pad), lambda i, k: (i, 0))
        scratch_shapes = [pltpu.VMEM((tb, C_pad), jnp.float32)]
        kernel = _linear_accum_kernel
        dims = ("parallel", "arbitrary")

    out_padded = pl.pallas_call(
        kernel,
        out_shape=jax.ShapeDtypeStruct((B, C_pad), out_dtype),
        grid_spec=pltpu.PrefetchScalarGridSpec(
            num_scalar_prefetch=0,
            grid=grid,
            in_specs=in_specs,
            out_specs=out_specs,
            scratch_shapes=scratch_shapes,
        ),
        compiler_params=pltpu.CompilerParams(
            dimension_semantics=dims,
            vmem_limit_bytes=vmem_limit,
        ),
    )(x_in, w_t, b2d)

    return out_padded[:, :C] if C_pad != C else out_padded


if __name__ == "__main__":
    key = jax.random.PRNGKey(0)
    kx, kw, kb, k2x, k2w, k2b = jax.random.split(key, 6)

    # --- Small shapes matching the module (force the Pallas path). ---
    batch, n_features, n_classes = 8, 32, 16
    x = jax.random.normal(kx, (batch, n_features), dtype=jnp.float32)
    bound = 1.0 / jnp.sqrt(jnp.float32(n_features))
    weight = jax.random.uniform(kw, (n_classes, n_features),
                                minval=-bound, maxval=bound, dtype=jnp.float32)
    bias = jax.random.uniform(kb, (n_classes,),
                              minval=-bound, maxval=bound, dtype=jnp.float32)

    out = logistic_regression_forward(x, weight, bias, force_pallas=True)
    out = jax.block_until_ready(out)
    ref = x @ weight.T + bias
    assert out.shape == (batch, n_classes)
    assert jnp.allclose(out, ref, atol=1e-5, rtol=1e-5)

    # --- Exercise the K-streamed (feature-tiled) + multi-batch-tile path. ---
    B2, F2, C2 = 48, 200, 20
    x2 = jax.random.normal(k2x, (B2, F2), dtype=jnp.float32)
    w2 = jax.random.uniform(k2w, (C2, F2), minval=-0.1, maxval=0.1,
                            dtype=jnp.float32)
    b2 = jax.random.uniform(k2b, (C2,), minval=-0.1, maxval=0.1,
                            dtype=jnp.float32)
    out2 = logistic_regression_forward(x2, w2, b2, force_pallas=True,
                                       tile_b=16, tile_k=128)
    out2 = jax.block_until_ready(out2)
    ref2 = x2 @ w2.T + b2
    assert out2.shape == (B2, C2)
    assert jnp.allclose(out2, ref2, atol=1e-4, rtol=1e-4)

    print("KERNEL_OK")
</pallas_src>

<mosaic_0001>
module attributes {stable_mosaic.version = 11 : i64} {
  func.func @_linear_kernel(%arg0: i32, %arg1: memref<8x32xf32, #tpu.memory_space<vmem>>, %arg2: memref<32x128xf32, #tpu.memory_space<vmem>>, %arg3: memref<1x128xf32, #tpu.memory_space<vmem>>, %arg4: memref<8x128xf32, #tpu.memory_space<vmem>>) attributes {dimension_semantics = [#tpu.dimension_semantics<parallel>], iteration_bounds = array<i64: 1>, scalar_prefetch = 0 : i64, scratch_operands = 0 : i64, tpu.core_type = #tpu.core_type<tc>, window_params = [{transform_indices = @transform_0, window_bounds = array<i64: 8, 32>}, {pipeline_mode = #tpu.pipeline_mode<synchronous>, transform_indices = @transform_1, window_bounds = array<i64: 32, 128>}, {pipeline_mode = #tpu.pipeline_mode<synchronous>, transform_indices = @transform_2, window_bounds = array<i64: 1, 128>}, {transform_indices = @transform_3, window_bounds = array<i64: 8, 128>}]} {
    %c0 = arith.constant 0 : index
    %c0_0 = arith.constant 0 : index
    %0 = vector.load %arg1[%c0, %c0_0] : memref<8x32xf32, #tpu.memory_space<vmem>>, vector<8x32xf32>
    %c0_1 = arith.constant 0 : index
    %c0_2 = arith.constant 0 : index
    %1 = vector.load %arg2[%c0_1, %c0_2] : memref<32x128xf32, #tpu.memory_space<vmem>>, vector<32x128xf32>
    %cst = arith.constant dense<0.000000e+00> : vector<8x128xf32>
    %2 = tpu.matmul %0, %1, %cst {dimension_numbers = #tpu.dot_dimension_numbers<[1], [0], [0], [1], [0, 0, 1, 1], [], []>} : vector<8x32xf32>, vector<32x128xf32>, vector<8x128xf32> -> vector<8x128xf32>
    %c0_3 = arith.constant 0 : index
    %c0_4 = arith.constant 0 : index
    %3 = vector.load %arg3[%c0_3, %c0_4] : memref<1x128xf32, #tpu.memory_space<vmem>>, vector<1x128xf32>
    %4 = vector.broadcast %3 : vector<1x128xf32> to vector<8x128xf32>
    %5 = arith.addf %2, %4 : vector<8x128xf32>
    %c0_5 = arith.constant 0 : index
    %c0_6 = arith.constant 0 : index
    %6 = vector.load %arg4[%c0_5, %c0_6] : memref<8x128xf32, #tpu.memory_space<vmem>>, vector<8x128xf32>
    tpu.vector_store %arg4[%c0_5, %c0_6], %5 {strides = array<i32>} : memref<8x128xf32, #tpu.memory_space<vmem>>, vector<8x128xf32>,
    return
  }
  func.func @transform_0(%arg0: i32) -> (i32, i32) {
    %c0_i32 = arith.constant 0 : i32
    %c0_i32_0 = arith.constant 0 : i32
    return %arg0, %c0_i32 : i32, i32
  }
  func.func @transform_1(%arg0: i32) -> (i32, i32) {
    %c0_i32 = arith.constant 0 : i32
    %c0_i32_0 = arith.constant 0 : i32
    %c0_i32_1 = arith.constant 0 : i32
    return %c0_i32, %c0_i32_0 : i32, i32
  }
  func.func @transform_2(%arg0: i32) -> (i32, i32) {
    %c0_i32 = arith.constant 0 : i32
    %c0_i32_0 = arith.constant 0 : i32
    %c0_i32_1 = arith.constant 0 : i32
    return %c0_i32, %c0_i32_0 : i32, i32
  }
  func.func @transform_3(%arg0: i32) -> (i32, i32) {
    %c0_i32 = arith.constant 0 : i32
    %c0_i32_0 = arith.constant 0 : i32
    return %arg0, %c0_i32 : i32, i32
  }
}

</mosaic_0001>

<llo_original>
// kernel: tpu_custom_call.1
$region0: #{tpu_custom_call.1}
  #allocation0 [shape = 'u32[]', space=smem, size = 0x4, offset = 0x4, fixed_abs, tag = 'smem constant byte address 0x4 - core index']
  #allocation1 [shape = 'u32[72,128]{1,0:T(1,128)}', space=vmem, size = 0x9000, scoped, tag = 'internal scratch']
  %s0 = inlined_call_operand.hbm [shape: f32[8,32], index: 0, kind: input, shape index: {}]
  %s1 = inlined_call_operand.hbm [shape: f32[32,128], index: 1, kind: input, shape index: {}]
  %s2 = inlined_call_operand.vmem [shape: f32[1,128], index: 2, kind: input, shape index: {}]
  %s3 = inlined_call_operand.hbm [shape: f32[8,128], index: 3, kind: output, shape index: {}]
  %s4 = sld [smem:[#allocation0]]
  $region30: #{tpu_custom_call.1} parent=0
    _
  %s6 = ssub.s32 1, %s4
  %s7 = scalar_select 0, %s6, %s4
  $region1: #{tpu_custom_call.1} parent=0
    #allocation2 [shape = 'u8[4096]{0}', space=vmem, size = 0x1000, scoped, tag = 'input window, operand 0, single buffered']
    #allocation3 [shape = 's32[1]{0}', space=sflag, size = 0x4, scoped, tag = 'scoped memory for tpu_custom_call.1']
    #allocation4 [shape = 's32[1]{0}', space=sflag, size = 0x4, scoped, tag = 'scoped memory for tpu_custom_call.1']
    #allocation5 [shape = 'u8[16384]{0}', space=vmem, size = 0x4000, scoped, tag = 'input window, operand 1, single buffered']
    #allocation6 [shape = 's32[1]{0}', space=sflag, size = 0x4, scoped, tag = 'scoped memory for tpu_custom_call.1']
    #allocation7 [shape = 'u8[4096]{0}', space=vmem, size = 0x1000, scoped, tag = 'output window, operand 0, single buffered']
    %8 = vsyncpa [#allocation3], 0
    %9 = vsyncpa [#allocation6], 0
    %10 = vsyncpa [#allocation4], 0
    // Predicated region
    $region2: #{tpu_custom_call.1} parent=1 // pred_check
      _
    $region3: #{tpu_custom_call.1} parent=1 // pred_check_branch
      %12 = sbr.rel (0) target = $region5
    $region4: #{tpu_custom_call.1} parent=1 // pred_region
      %14 = vsyncadd [#allocation3], 0
      %s16 = sshll.u32 %s0, 4
      %s17 = int_to_ptr.hbm [resolvable:$true] %s16
      %s18 = sshll.u32 [#allocation2], 4
      %s19 = int_to_ptr.vmem [resolvable:$true] %s18
      %21 = dma.hbm_to_vmem [thread:$0]  %s17, 128, %s19, [#allocation3]
    $region5: #{tpu_custom_call.1} parent=1 // pred_fallthru
      _
    // Predicated region
    $region6: #{tpu_custom_call.1} parent=1 // pred_check
      _
    $region7: #{tpu_custom_call.1} parent=1 // pred_check_branch
      %23 = sbr.rel (0) target = $region9
    $region8: #{tpu_custom_call.1} parent=1 // pred_region
      %25 = vsyncadd [#allocation6], 0
      %s26 = sshll.u32 %s1, 4
      %s27 = int_to_ptr.hbm [resolvable:$true] %s26
      %s28 = sshll.u32 [#allocation5], 4
      %s29 = int_to_ptr.vmem [resolvable:$true] %s28
      %34 = dma.hbm_to_vmem [thread:$0]  %s27, 512, %s29, [#allocation6], 128, 128, 8
    $region9: #{tpu_custom_call.1} parent=1 // pred_fallthru
      _
    // Predicated region
    $region10: #{tpu_custom_call.1} parent=1 // pred_check
      _
    $region11: #{tpu_custom_call.1} parent=1 // pred_check_branch
      %36 = sbr.rel (0) target = $region13
    $region12: #{tpu_custom_call.1} parent=1 // pred_region
      _
    $region13: #{tpu_custom_call.1} parent=1 // pred_fallthru
      _
    // Predicated region
    $region14: #{tpu_custom_call.1} parent=1 // pred_check
      _
    $region15: #{tpu_custom_call.1} parent=1 // pred_check_branch
      %38 = sbr.rel (0) target = $region17
    $region16: #{tpu_custom_call.1} parent=1 // pred_region
      %40 = dma.done [#allocation3], 128
    $region17: #{tpu_custom_call.1} parent=1 // pred_fallthru
      _
    // Predicated region
    $region18: #{tpu_custom_call.1} parent=1 // pred_check
      _
    $region19: #{tpu_custom_call.1} parent=1 // pred_check_branch
      %42 = sbr.rel (0) target = $region21
    $region20: #{tpu_custom_call.1} parent=1 // pred_region
      %44 = dma.done [#allocation6], 512
    $region21: #{tpu_custom_call.1} parent=1 // pred_fallthru
      _
    %v45 = vld [vmem:[#allocation2] sm:$0xff]
    %v46 = vld [vmem:[#allocation5] sm:$0xff]
    %v47 = vld [vmem:[#allocation5 + $0x8] sm:$0xff]
    %v48 = vld [vmem:[#allocation5 + $0x10] sm:$0xff]
    %v49 = vld [vmem:[#allocation5 + $0x18] sm:$0xff]
    %v50 = vld [vmem:[%s2] sm:$0x1]
    %v52 = vperm.slane %v50, 0
    %vm54 = vcmask 261120
    %v56 = vsel %vm54, %v45, 0
    %58 = vmatpush.msra.mxu0 0.0
    %59 = vmatpush.msra.mxu0 0.0
    %60 = vmatpush.msra.mxu0 0.0
    %61 = vmatpush.msra.mxu0 0.0
    %62 = vmatpush.msra.mxu0 0.0
    %63 = vmatpush.msra.mxu0 0.0
    %64 = vmatpush.msra.mxu0 0.0
    %65 = vmatpush.msra.mxu0 0.0
    %66 = vmatpush.msra.mxu0 0.0
    %67 = vmatpush.msra.mxu0 0.0
    %68 = vmatpush.msra.mxu0 0.0
    %69 = vmatpush.msra.mxu0 0.0
    %70 = vmatpush.msra.mxu0 %v49
    %71 = vmatpush.msra.mxu0 %v48
    %72 = vmatpush.msra.mxu0 %v47
    %73 = vmatpush.msra.mxu0 %v46
    %74 = vmatmul.f32.gmra.mxu0 %v56
    %v75 = vpop.f32.mrf.mxu0
    %v76 = vadd.f32 %v52, %v75
    %77 = vdwg.mxu0
    %78 = vst [vmem:[#allocation7] sm:$0xff] %v76
    // Predicated region
    $region22: #{tpu_custom_call.1} parent=1 // pred_check
      _
    $region23: #{tpu_custom_call.1} parent=1 // pred_check_branch
      %80 = sbr.rel (0) target = $region25
    $region24: #{tpu_custom_call.1} parent=1 // pred_region
      %82 = vsyncadd [#allocation4], 0
      %s84 = sshll.u32 [#allocation7], 4
      %s85 = int_to_ptr.vmem [resolvable:$true] %s84
      %s86 = sshll.u32 %s3, 4
      %s87 = int_to_ptr.hbm [resolvable:$true] %s86
      %89 = dma.vmem_to_hbm [thread:$0]  %s85, 128, %s87, [#allocation4]
    $region25: #{tpu_custom_call.1} parent=1 // pred_fallthru
      _
    // Predicated region
    $region26: #{tpu_custom_call.1} parent=1 // pred_check
      _
    $region27: #{tpu_custom_call.1} parent=1 // pred_check_branch
      %91 = sbr.rel (0) target = $region29
    $region28: #{tpu_custom_call.1} parent=1 // pred_region
      %93 = dma.done [#allocation4], 128
    $region29: #{tpu_custom_call.1} parent=1 // pred_fallthru
      _
    %94 = vsyncpa [#allocation3], 1
    %95 = vsyncpa [#allocation6], 1
    %96 = vsyncpa [#allocation4], 1

</llo_original>
